<compile_context>
chip_gen: v5e
topology: v5e:2x2
jax: 0.10.0
libtpu: 0.0.40
codegen_flags: <defaults>
</compile_context>

<pallas_src>
import functools

import jax
import jax.numpy as jnp
from jax.experimental import pallas as pl
from jax.experimental.pallas import tpu as pltpu

IN_CH, HIDDEN, LATENT = 4, 32, 8
_VMEM_LIMIT = 32 * 1024 * 1024   # safe on every generation (v7x physical = 64 MiB)


# ---------------------------------------------------------------------------
# Pallas kernel 1: fused encoder  (conv1 k=3,s=2,p=1 -> tanh -> conv2 k=1)
#   All operands keep the time axis last (lane axis):
#     xs : (3*C_in, Tt) bf16   stacked conv taps for this time tile
#     w1 : (HIDDEN, 3*C_in) bf16    b1 : (HIDDEN, 1) f32
#     w2 : (LATENT, HIDDEN) f32     b2 : (LATENT, 1) f32
#     o  : (LATENT, Tt) f32    lane-dense stores, already NCL
# ---------------------------------------------------------------------------
def _encoder_fused_kernel(xs_ref, w1_ref, b1_ref, w2_ref, b2_ref, o_ref):
    xs = xs_ref[...]                                               # (3C, Tt) bf16
    h = jnp.dot(w1_ref[...], xs, preferred_element_type=jnp.float32)
    h = jnp.tanh(h + b1_ref[...])                                  # (H, Tt) f32
    z = jnp.dot(w2_ref[...], h, preferred_element_type=jnp.float32) + b2_ref[...]
    o_ref[...] = z.astype(o_ref.dtype)                             # (L, Tt)


def pallas_fused_encoder(stacked, w1f, b1, w2f, b2, *, tt_max=32768):
    """stacked: (B, 3*C_in, T) bf16 -> z: (B, LATENT, T) f32."""
    B, C3, T = stacked.shape
    H = w1f.shape[0]
    Lt = w2f.shape[0]
    if T <= tt_max:
        tt = T                                   # full time axis in one tile
    else:
        tt = max(128, (tt_max // 128) * 128)     # lane tile, multiple of 128
    grid = (B, pl.cdiv(T, tt))
    flops = 2 * B * T * (C3 * H + H * Lt)
    bytes_accessed = (2 * B * C3 * T + 4 * B * Lt * T
                      + 2 * H * C3 + 4 * H + 4 * Lt * H + 4 * Lt)
    return pl.pallas_call(
        _encoder_fused_kernel,
        out_shape=jax.ShapeDtypeStruct((B, Lt, T), jnp.float32),
        grid=grid,
        in_specs=[
            pl.BlockSpec((None, C3, tt), lambda b, t: (b, 0, t)),
            pl.BlockSpec((H, C3), lambda b, t: (0, 0)),
            pl.BlockSpec((H, 1), lambda b, t: (0, 0)),
            pl.BlockSpec((Lt, H), lambda b, t: (0, 0)),
            pl.BlockSpec((Lt, 1), lambda b, t: (0, 0)),
        ],
        out_specs=pl.BlockSpec((None, Lt, tt), lambda b, t: (b, 0, t)),
        compiler_params=pltpu.CompilerParams(
            dimension_semantics=("parallel", "parallel"),
            vmem_limit_bytes=_VMEM_LIMIT,
        ),
        cost_estimate=pl.CostEstimate(
            flops=int(flops),
            transcendentals=int(H * B * T),
            bytes_accessed=int(bytes_accessed),
        ),
    )(stacked, w1f, b1, w2f, b2)


# ---------------------------------------------------------------------------
# Pallas kernel 2: MMD regularizer (compute_mmd), flash-style tiled.
#   Grid (ni, ni) over (row-tile i, col-tile j); j (reduction) is innermost.
#   Per-row partials Sxx/Syy/Sxy accumulate in a (3, 128) VMEM scratch
#   (init at j==0, written to the (ni, 3, 128) output at j==last) and are
#   reduced across row tiles in plain JAX.  xx/yy only evaluated for j >= i
#   (symmetry); masking is only compiled in when N % nt != 0.
# ---------------------------------------------------------------------------
def _mmd_kernel(xi_ref, xj_ref, yi_ref, yj_ref, o_ref, acc_ref,
                *, n, nt, inv_d2, masked):
    i = pl.program_id(0)
    j = pl.program_id(1)

    @pl.when(j == 0)
    def _init():
        acc_ref[...] = jnp.zeros_like(acc_ref)

    xi = xi_ref[...]          # (nt, D)  row tile
    xj = xj_ref[...]          # (D, nt)  col tile (lane-major N)
    yi = yi_ref[...]
    yj = yj_ref[...]

    if masked:
        row_ok = (jax.lax.broadcasted_iota(jnp.int32, (nt, 1), 0) + i * nt) < n
        col_ok = (jax.lax.broadcasted_iota(jnp.int32, (1, nt), 1) + j * nt) < n
        mask = jnp.logical_and(row_ok, col_ok)                      # (nt, nt)

    def tile_sum(a_i, b_j):
        # pairwise sq distances via |a|^2 + |b|^2 - 2ab, clamped at 0
        ab = jnp.dot(a_i, b_j, preferred_element_type=jnp.float32)  # (nt, nt)
        aa = jnp.sum(a_i * a_i, axis=1, keepdims=True)              # (nt, 1)
        bb = jnp.sum(b_j * b_j, axis=0, keepdims=True)              # (1, nt)
        sq = jnp.maximum(aa + bb - 2.0 * ab, 0.0)
        k = jnp.exp(-sq * inv_d2)
        if masked:
            k = jnp.where(mask, k, 0.0)
        return jnp.sum(k)                                           # scalar

    # Sxy needs the full (i, j) grid.
    acc_ref[2:3, :] += jnp.full((1, 128), tile_sum(xi, yj), jnp.float32)

    # Sxx / Syy are symmetric: evaluate only j >= i, double off-diagonal tiles.
    @pl.when(j >= i)
    def _symmetric():
        w = jnp.where(j > i, 2.0, 1.0).astype(jnp.float32)
        acc_ref[0:1, :] += w * jnp.full((1, 128), tile_sum(xi, xj), jnp.float32)
        acc_ref[1:2, :] += w * jnp.full((1, 128), tile_sum(yi, yj), jnp.float32)

    @pl.when(j == pl.num_programs(1) - 1)
    def _finalize():
        o_ref[...] = acc_ref[...]


def pallas_mmd(x, y, *, nt_max=512):
    """x, y: (N, D) samples -> scalar mmd (matches compute_mmd)."""
    N, D = x.shape
    if N <= nt_max:
        nt = N
    else:
        nt = max(128, (nt_max // 128) * 128)
    ni = pl.cdiv(N, nt)
    masked = (N % nt) != 0
    xT = x.T                                   # (D, N): N on the lane axis
    yT = y.T
    kernel = functools.partial(_mmd_kernel, n=N, nt=nt,
                               inv_d2=1.0 / float(D * D), masked=masked)
    partials = pl.pallas_call(
        kernel,
        out_shape=jax.ShapeDtypeStruct((ni, 3, 128), jnp.float32),
        grid=(ni, ni),
        in_specs=[
            pl.BlockSpec((nt, D), lambda i, j: (i, 0)),   # x row-tile
            pl.BlockSpec((D, nt), lambda i, j: (0, j)),   # x col-tile (lane-major)
            pl.BlockSpec((nt, D), lambda i, j: (i, 0)),   # y row-tile
            pl.BlockSpec((D, nt), lambda i, j: (0, j)),   # y col-tile
        ],
        out_specs=pl.BlockSpec((None, 3, 128), lambda i, j: (i, 0, 0)),
        scratch_shapes=[pltpu.VMEM((3, 128), jnp.float32)],
        compiler_params=pltpu.CompilerParams(
            # rows are independent (2nd TensorCore on v7x); j is the reduction.
            dimension_semantics=("parallel", "arbitrary"),
            vmem_limit_bytes=_VMEM_LIMIT,
        ),
        cost_estimate=pl.CostEstimate(
            flops=int(2 * (2 * D + 6) * N * N),
            transcendentals=int(2 * N * N),
            bytes_accessed=int(4 * (2 * N * D + 2 * D * nt * ni * ni)
                               + 4 * ni * 3 * 128),
        ),
    )(x, xT, y, yT)
    sums = jnp.sum(partials[:, :, 0], axis=0)              # (3,) Sxx, Syy, Sxy
    return (sums[0] + sums[1] - 2.0 * sums[2]) / float(N * N)


# ---------------------------------------------------------------------------
# WasserteinEncoder (JAX/Pallas version)
# ---------------------------------------------------------------------------
def init_params(key):
    k1, k2 = jax.random.split(key)
    return {
        "w1": 0.1 * jax.random.normal(k1, (HIDDEN, IN_CH, 3), jnp.float32),
        "b1": jnp.zeros((HIDDEN,), jnp.float32),
        "w2": 0.1 * jax.random.normal(k2, (LATENT, HIDDEN, 1), jnp.float32),
        "b2": jnp.zeros((LATENT,), jnp.float32),
    }


def encoder_apply(params, x, *, tt_max=32768):
    """Conv1d(4->32,k=3,s=2,p=1) -> tanh -> Conv1d(32->8,k=1), fused in Pallas."""
    B, C_in, L = x.shape
    k, stride, pad = 3, 2, 1
    T = (L + 2 * pad - k) // stride + 1
    # Even/odd phase split of the padded signal: output t needs padded samples
    # 2t, 2t+1, 2t+2  ->  E[t], O[t], E[t+1].  Stacking the three tap views
    # along channels turns the conv into ONE matmul per tile with time on the
    # lane axis (no HBM im2col gather, no overlapping tiles).  The stacked
    # tensor is emitted in bf16 to halve its HBM traffic.
    lp = 2 * (T + 1)
    xp = jnp.pad(x, ((0, 0), (0, 0), (pad, lp - L - pad)))
    xr = xp.reshape(B, C_in, T + 1, 2)
    even, odd = xr[..., 0], xr[..., 1]
    stacked = jnp.concatenate(
        [even[..., :T], odd[..., :T], even[..., 1:T + 1]], axis=1)   # (B, 3C, T)
    stacked = stacked.astype(jnp.bfloat16)

    w1 = params["w1"]                                                 # (H, C, 3)
    w1f = jnp.concatenate([w1[:, :, 0], w1[:, :, 1], w1[:, :, 2]],
                          axis=1).astype(jnp.bfloat16)
    b1 = params["b1"].reshape(-1, 1)
    w2f = params["w2"][:, :, 0]                                       # (L, H)
    b2 = params["b2"].reshape(-1, 1)
    return pallas_fused_encoder(stacked, w1f, b1, w2f, b2, tt_max=tt_max)


def wasserstein_encoder_forward(params, x, warmed_up=False):
    z = encoder_apply(params, x)
    if warmed_up:                        # buffer `warmed_up` == 0 by default
        z = jax.lax.stop_gradient(z)     # semantic equivalent of .detach()
    return z


def reparametrize(z, key, noise_augmentation=0):
    # z: (B, C, T);  z.permute(0,2,1).reshape(-1, C) as in the reference.
    B, C, T = z.shape
    z_reshaped = jnp.transpose(z, (0, 2, 1)).reshape(-1, C)           # (N, C)
    y = jax.random.normal(key, z_reshaped.shape, z_reshaped.dtype)
    reg = pallas_mmd(z_reshaped, y)
    if noise_augmentation:
        # TODO(synk): noise_augmentation concat path (unused, default 0)
        pass
    return z, reg


# ---------------------------------------------------------------------------
# Pure-JAX references (correctness checks only)
# ---------------------------------------------------------------------------
def _ref_encoder(params, x):
    dn = ("NCH", "OIH", "NCH")
    h = jax.lax.conv_general_dilated(
        x, params["w1"], window_strides=(2,), padding=[(1, 1)],
        dimension_numbers=dn, precision=jax.lax.Precision.HIGHEST)
    h = jnp.tanh(h + params["b1"][None, :, None])
    z = jax.lax.conv_general_dilated(
        h, params["w2"], window_strides=(1,), padding=[(0, 0)],
        dimension_numbers=dn, precision=jax.lax.Precision.HIGHEST)
    return z + params["b2"][None, :, None]


def _ref_mmd(x_nd, y_nd):
    def mk(a, b):
        ki = jnp.mean((a[:, None, :] - b[None, :, :]) ** 2, axis=2) / a.shape[-1]
        return jnp.mean(jnp.exp(-ki))
    return mk(x_nd, x_nd) + mk(y_nd, y_nd) - 2.0 * mk(x_nd, y_nd)


if __name__ == "__main__":
    key = jax.random.PRNGKey(0)
    k_x, k_p, k_n, k_x2, k_n2 = jax.random.split(key, 5)

    params = init_params(k_p)

    # --- small shapes: single tile, maskless MMD -----------------------------
    x = jax.random.normal(k_x, (2, IN_CH, 16), jnp.float32)   # NCL layout
    z = wasserstein_encoder_forward(params, x, warmed_up=False)
    z = jax.block_until_ready(z)
    assert z.shape == (2, LATENT, 8), z.shape

    z_ref = _ref_encoder(params, x)
    assert jnp.allclose(z, z_ref, rtol=1e-2, atol=1e-2), \
        float(jnp.max(jnp.abs(z - z_ref)))

    z_out, reg = reparametrize(z, k_n, noise_augmentation=0)
    reg = jax.block_until_ready(reg)
    assert jnp.isfinite(reg)

    z_rs = jnp.transpose(z, (0, 2, 1)).reshape(-1, LATENT)
    y = jax.random.normal(k_n, z_rs.shape, z_rs.dtype)
    reg_ref = _ref_mmd(z_rs, y)
    assert jnp.allclose(reg, reg_ref, rtol=1e-3, atol=1e-4), \
        (float(reg), float(reg_ref))

    # --- larger shapes: multi-tile encoder (ragged T) + masked/tiled MMD -----
    x2 = jax.random.normal(k_x2, (2, IN_CH, 600), jnp.float32)     # T = 300
    z2 = jax.block_until_ready(encoder_apply(params, x2, tt_max=128))
    assert z2.shape == (2, LATENT, 300), z2.shape
    z2_ref = _ref_encoder(params, x2)
    assert jnp.allclose(z2, z2_ref, rtol=1e-2, atol=1e-2), \
        float(jnp.max(jnp.abs(z2 - z2_ref)))

    z2_rs = jnp.transpose(z2, (0, 2, 1)).reshape(-1, LATENT)       # (600, 8)
    y2 = jax.random.normal(k_n2, z2_rs.shape, z2_rs.dtype)
    reg2 = jax.block_until_ready(pallas_mmd(z2_rs, y2, nt_max=128))
    reg2_ref = _ref_mmd(z2_rs, y2)
    assert jnp.allclose(reg2, reg2_ref, rtol=1e-3, atol=1e-4), \
        (float(reg2), float(reg2_ref))

    print("KERNEL_OK")
</pallas_src>

<mosaic_0001>
module attributes {stable_mosaic.version = 11 : i64} {
  func.func @_encoder_fused_kernel(%arg0: i32, %arg1: i32, %arg2: memref<1x12x8xbf16, #tpu.memory_space<vmem>>, %arg3: memref<32x12xbf16, #tpu.memory_space<vmem>>, %arg4: memref<32x1xf32, #tpu.memory_space<vmem>>, %arg5: memref<8x32xf32, #tpu.memory_space<vmem>>, %arg6: memref<8x1xf32, #tpu.memory_space<vmem>>, %arg7: memref<1x8x8xf32, #tpu.memory_space<vmem>>) attributes {dimension_semantics = [#tpu.dimension_semantics<parallel>, #tpu.dimension_semantics<parallel>], iteration_bounds = array<i64: 2, 1>, scalar_prefetch = 0 : i64, scratch_operands = 0 : i64, tpu.core_type = #tpu.core_type<tc>, window_params = [{transform_indices = @transform_0, window_bounds = array<i64: 1, 12, 8>}, {pipeline_mode = #tpu.pipeline_mode<synchronous>, transform_indices = @transform_1, window_bounds = array<i64: 32, 12>}, {pipeline_mode = #tpu.pipeline_mode<synchronous>, transform_indices = @transform_2, window_bounds = array<i64: 32, 1>}, {pipeline_mode = #tpu.pipeline_mode<synchronous>, transform_indices = @transform_3, window_bounds = array<i64: 8, 32>}, {pipeline_mode = #tpu.pipeline_mode<synchronous>, transform_indices = @transform_4, window_bounds = array<i64: 8, 1>}, {transform_indices = @transform_5, window_bounds = array<i64: 1, 8, 8>}]} {
    %c0 = arith.constant 0 : index
    %c0_0 = arith.constant 0 : index
    %c0_1 = arith.constant 0 : index
    %0 = vector.load %arg2[%c0, %c0_0, %c0_1] : memref<1x12x8xbf16, #tpu.memory_space<vmem>>, vector<1x12x8xbf16>
    %1 = vector.shape_cast %0 : vector<1x12x8xbf16> to vector<12x8xbf16>
    %c0_2 = arith.constant 0 : index
    %c0_3 = arith.constant 0 : index
    %2 = vector.load %arg3[%c0_2, %c0_3] : memref<32x12xbf16, #tpu.memory_space<vmem>>, vector<32x12xbf16>
    %cst = arith.constant dense<0.000000e+00> : vector<32x8xf32>
    %3 = tpu.matmul %2, %1, %cst {dimension_numbers = #tpu.dot_dimension_numbers<[1], [0], [0], [1], [0, 0, 1, 1], [], []>} : vector<32x12xbf16>, vector<12x8xbf16>, vector<32x8xf32> -> vector<32x8xf32>
    %c0_4 = arith.constant 0 : index
    %c0_5 = arith.constant 0 : index
    %4 = vector.load %arg4[%c0_4, %c0_5] : memref<32x1xf32, #tpu.memory_space<vmem>>, vector<32x1xf32>
    %5 = vector.broadcast %4 : vector<32x1xf32> to vector<32x8xf32>
    %6 = arith.addf %3, %5 : vector<32x8xf32>
    %7 = math.tanh %6 : vector<32x8xf32>
    %c0_6 = arith.constant 0 : index
    %c0_7 = arith.constant 0 : index
    %8 = vector.load %arg5[%c0_6, %c0_7] : memref<8x32xf32, #tpu.memory_space<vmem>>, vector<8x32xf32>
    %cst_8 = arith.constant dense<0.000000e+00> : vector<8x8xf32>
    %9 = tpu.matmul %8, %7, %cst_8 {dimension_numbers = #tpu.dot_dimension_numbers<[1], [0], [0], [1], [0, 0, 1, 1], [], []>} : vector<8x32xf32>, vector<32x8xf32>, vector<8x8xf32> -> vector<8x8xf32>
    %c0_9 = arith.constant 0 : index
    %c0_10 = arith.constant 0 : index
    %10 = vector.load %arg6[%c0_9, %c0_10] : memref<8x1xf32, #tpu.memory_space<vmem>>, vector<8x1xf32>
    %11 = vector.broadcast %10 : vector<8x1xf32> to vector<8x8xf32>
    %12 = arith.addf %9, %11 : vector<8x8xf32>
    %c0_11 = arith.constant 0 : index
    %c0_12 = arith.constant 0 : index
    %c0_13 = arith.constant 0 : index
    %13 = vector.load %arg7[%c0_11, %c0_12, %c0_13] : memref<1x8x8xf32, #tpu.memory_space<vmem>>, vector<1x8x8xf32>
    %14 = vector.shape_cast %13 : vector<1x8x8xf32> to vector<8x8xf32>
    %15 = vector.shape_cast %12 : vector<8x8xf32> to vector<1x8x8xf32>
    tpu.vector_store %arg7[%c0_11, %c0_12, %c0_13], %15 {strides = array<i32>} : memref<1x8x8xf32, #tpu.memory_space<vmem>>, vector<1x8x8xf32>,
    return
  }
  func.func @transform_0(%arg0: i32, %arg1: i32) -> (i32, i32, i32) {
    %c0_i32 = arith.constant 0 : i32
    %c0_i32_0 = arith.constant 0 : i32
    return %arg0, %c0_i32, %arg1 : i32, i32, i32
  }
  func.func @transform_1(%arg0: i32, %arg1: i32) -> (i32, i32) {
    %c0_i32 = arith.constant 0 : i32
    %c0_i32_0 = arith.constant 0 : i32
    %c0_i32_1 = arith.constant 0 : i32
    return %c0_i32, %c0_i32_0 : i32, i32
  }
  func.func @transform_2(%arg0: i32, %arg1: i32) -> (i32, i32) {
    %c0_i32 = arith.constant 0 : i32
    %c0_i32_0 = arith.constant 0 : i32
    %c0_i32_1 = arith.constant 0 : i32
    return %c0_i32, %c0_i32_0 : i32, i32
  }
  func.func @transform_3(%arg0: i32, %arg1: i32) -> (i32, i32) {
    %c0_i32 = arith.constant 0 : i32
    %c0_i32_0 = arith.constant 0 : i32
    %c0_i32_1 = arith.constant 0 : i32
    return %c0_i32, %c0_i32_0 : i32, i32
  }
  func.func @transform_4(%arg0: i32, %arg1: i32) -> (i32, i32) {
    %c0_i32 = arith.constant 0 : i32
    %c0_i32_0 = arith.constant 0 : i32
    %c0_i32_1 = arith.constant 0 : i32
    return %c0_i32, %c0_i32_0 : i32, i32
  }
  func.func @transform_5(%arg0: i32, %arg1: i32) -> (i32, i32, i32) {
    %c0_i32 = arith.constant 0 : i32
    %c0_i32_0 = arith.constant 0 : i32
    return %arg0, %c0_i32, %arg1 : i32, i32, i32
  }
}

</mosaic_0001>

<llo_original>
// kernel: tpu_custom_call.1
$region0: #{tpu_custom_call.1}
  #allocation0 [shape = 'u32[]', space=smem, size = 0x4, offset = 0x4, fixed_abs, tag = 'smem constant byte address 0x4 - core index']
  #allocation1 [shape = 'u32[72,128]{1,0:T(1,128)}', space=vmem, size = 0x9000, scoped, tag = 'internal scratch']
  %s0 = inlined_call_operand.vmem [shape: bf16[2,12,8], index: 0, kind: input, shape index: {}]
  %s1 = inlined_call_operand.vmem [shape: bf16[32,12], index: 1, kind: input, shape index: {}]
  %s2 = inlined_call_operand.vmem [shape: f32[32,1], index: 2, kind: input, shape index: {}]
  %s3 = inlined_call_operand.vmem [shape: f32[8,32], index: 3, kind: input, shape index: {}]
  %s4 = inlined_call_operand.vmem [shape: f32[8,1], index: 4, kind: input, shape index: {}]
  %s5 = inlined_call_operand.hbm [shape: f32[2,8,8], index: 5, kind: output, shape index: {}]
  %s6 = sld [smem:[#allocation0]]
  $region53: #{tpu_custom_call.1} parent=0
    _
  %s8 = ssub.s32 1, %s6
  %s9 = scalar_select 0, %s8, %s6
  $region1: #{tpu_custom_call.1} parent=0
    #allocation2 [shape = 'u8[8192]{0}', space=vmem, size = 0x2000, scoped, tag = 'output window, operand 0']
    #allocation3 [shape = 's32[2]{0}', space=sflag, size = 0x8, scoped, tag = 'scoped memory for tpu_custom_call.1']
    %10 = vsyncpa [#allocation3], 0
    %s11 = scalar_lea.sflag [#allocation3], 1
    %12 = vsyncpa %s11, 0
    loop: start=0, step=1, limit=4
    $region2: #{tpu_custom_call.1} parent=1 // loop_pre_header
      _
    $region3: #{tpu_custom_call.1} parent=1 // loop_header
      %s14 = sphi 0, %s18
      %p15 = scmp.ge.s32.totalorder %s14, 4
      %s21 = sphi 0, %s33
      %s22 = sphi 0, %s29
      %s23 = sphi 0, %s21
      %s24 = sphi 0, %s22
      %s25 = sphi 0, %s23
      %s26 = sphi 0, %s24
      %s38 = sphi 0, %s40
      %s41 = sphi 0, %s38
      %s42 = sphi 0, %s41
      %s58 = sphi 0, %s42
      %s62 = sphi 0, %s62
      %s64 = sphi 0, %s62
      %s65 = sphi 0, %s64
      %s79 = sphi 0, %s65
      %s83 = sphi 0, %s83
      %s85 = sphi 0, %s83
      %s86 = sphi 0, %s85
      %s100 = sphi 0, %s86
      %s104 = sphi 0, %s104
      %s106 = sphi 0, %s104
      %s107 = sphi 0, %s106
      %s121 = sphi 0, %s107
      %s125 = sphi 0, %s125
      %s127 = sphi 0, %s125
      %s128 = sphi 0, %s127
      %s142 = sphi 0, %s128
      %s150 = sphi 0, %s152
      %s153 = sphi 0, %s150
      %s154 = sphi 0, %s153
      %s170 = sphi 0, %s154
    $region4: #{tpu_custom_call.1} parent=1 // loop_header_branch
      %17 = sbr.rel (%p15) target = $region8
    $region5: #{tpu_custom_call.1} parent=1 // loop_body
      %s19 = ssub.s32 %s14, 1
      %s20 = ssub.s32 %s14, 2
      %s27 = sadd.s32 1, %s22
      %p28 = scmp.ge.s32.totalorder %s27, 1
      %s29 = scalar_select %p28, 0, %s27
      %s30 = sadd.s32 1, %s21
      %s31 = scalar_select %p28, %s30, %s21
      %p32 = scmp.ge.s32.totalorder %s31, 2
      %s33 = scalar_select %p32, 0, %s31
      %s34 = ssub.s32 %s21, %s33
      %s35 = ssub.s32 %s22, %s29
      %s36 = sor.u32 %s34, %s35
      %p37 = scmp.eq.s32.totalorder %s36, 0
      %s39 = sadd.s32 %s38, 1
      %s40 = scalar_select %p37, %s38, %s39
      %p43 = pneg %p37
      %p44 = scmp.eq.s32.totalorder %s14, 1
      %p45 = por %p43, %p44
      %p46 = scmp.ne.s32.totalorder %s38, %s41
      %p47 = scmp.eq.s32.totalorder %s14, 0
      %p48 = por %p46, %p47
      %p49 = scmp.ne.s32.totalorder %s38, %s41
      %p50 = scmp.eq.s32.totalorder %s19, 1
      %p51 = por %p49, %p50
      %p52 = scmp.ne.s32.totalorder %s41, %s42
      %p53 = scmp.eq.s32.totalorder %s19, 0
      %p54 = por %p52, %p53
      %p55 = scmp.ne.s32.totalorder %s41, %s42
      %p56 = scmp.eq.s32.totalorder %s20, 1
      %p57 = por %p55, %p56
      %p59 = scmp.ne.s32.totalorder %s42, %s58
      %p60 = scmp.eq.s32.totalorder %s20, 0
      %p61 = por %p59, %p60
      %s63 = sadd.s32 %s62, 1
      %p66 = scmp.eq.s32.totalorder %s14, 1
      %p67 = scmp.ne.s32.totalorder %s62, %s64
      %p68 = scmp.eq.s32.totalorder %s14, 0
      %p69 = por %p67, %p68
      %p70 = scmp.ne.s32.totalorder %s62, %s64
      %p71 = scmp.eq.s32.totalorder %s19, 1
      %p72 = por %p70, %p71
      %p73 = scmp.ne.s32.totalorder %s64, %s65
      %p74 = scmp.eq.s32.totalorder %s19, 0
      %p75 = por %p73, %p74
      %p76 = scmp.ne.s32.totalorder %s64, %s65
      %p77 = scmp.eq.s32.totalorder %s20, 1
      %p78 = por %p76, %p77
      %p80 = scmp.ne.s32.totalorder %s65, %s79
      %p81 = scmp.eq.s32.totalorder %s20, 0
      %p82 = por %p80, %p81
      %s84 = sadd.s32 %s83, 1
      %p87 = scmp.eq.s32.totalorder %s14, 1
      %p88 = scmp.ne.s32.totalorder %s83, %s85
      %p89 = scmp.eq.s32.totalorder %s14, 0
      %p90 = por %p88, %p89
      %p91 = scmp.ne.s32.totalorder %s83, %s85
      %p92 = scmp.eq.s32.totalorder %s19, 1
      %p93 = por %p91, %p92
      %p94 = scmp.ne.s32.totalorder %s85, %s86
      %p95 = scmp.eq.s32.totalorder %s19, 0
      %p96 = por %p94, %p95
      %p97 = scmp.ne.s32.totalorder %s85, %s86
      %p98 = scmp.eq.s32.totalorder %s20, 1
      %p99 = por %p97, %p98
      %p101 = scmp.ne.s32.totalorder %s86, %s100
      %p102 = scmp.eq.s32.totalorder %s20, 0
      %p103 = por %p101, %p102
      %s105 = sadd.s32 %s104, 1
      %p108 = scmp.eq.s32.totalorder %s14, 1
      %p109 = scmp.ne.s32.totalorder %s104, %s106
      %p110 = scmp.eq.s32.totalorder %s14, 0
      %p111 = por %p109, %p110
      %p112 = scmp.ne.s32.totalorder %s104, %s106
      %p113 = scmp.eq.s32.totalorder %s19, 1
      %p114 = por %p112, %p113
      %p115 = scmp.ne.s32.totalorder %s106, %s107
      %p116 = scmp.eq.s32.totalorder %s19, 0
      %p117 = por %p115, %p116
      %p118 = scmp.ne.s32.totalorder %s106, %s107
      %p119 = scmp.eq.s32.totalorder %s20, 1
      %p120 = por %p118, %p119
      %p122 = scmp.ne.s32.totalorder %s107, %s121
      %p123 = scmp.eq.s32.totalorder %s20, 0
      %p124 = por %p122, %p123
      %s126 = sadd.s32 %s125, 1
      %p129 = scmp.eq.s32.totalorder %s14, 1
      %p130 = scmp.ne.s32.totalorder %s125, %s127
      %p131 = scmp.eq.s32.totalorder %s14, 0
      %p132 = por %p130, %p131
      %p133 = scmp.ne.s32.totalorder %s125, %s127
      %p134 = scmp.eq.s32.totalorder %s19, 1
      %p135 = por %p133, %p134
      %p136 = scmp.ne.s32.totalorder %s127, %s128
      %p137 = scmp.eq.s32.totalorder %s19, 0
      %p138 = por %p136, %p137
      %p139 = scmp.ne.s32.totalorder %s127, %s128
      %p140 = scmp.eq.s32.totalorder %s20, 1
      %p141 = por %p139, %p140
      %p143 = scmp.ne.s32.totalorder %s128, %s142
      %p144 = scmp.eq.s32.totalorder %s20, 0
      %p145 = por %p143, %p144
      %s146 = ssub.s32 %s21, %s33
      %s147 = ssub.s32 %s22, %s29
      %s148 = sor.u32 %s146, %s147
      %p149 = scmp.eq.s32.totalorder %s148, 0
      %s151 = sadd.s32 %s150, 1
      %s152 = scalar_select %p149, %s150, %s151
      %p155 = pneg %p149
      %p156 = scmp.eq.s32.totalorder %s14, 1
      %p157 = por %p155, %p156
      %p158 = scmp.ne.s32.totalorder %s150, %s153
      %p159 = scmp.eq.s32.totalorder %s14, 0
      %p160 = por %p158, %p159
      %p161 = scmp.ne.s32.totalorder %s150, %s153
      %p162 = scmp.eq.s32.totalorder %s19, 1
      %p163 = por %p161, %p162
      %p164 = scmp.ne.s32.totalorder %s153, %s154
      %p165 = scmp.eq.s32.totalorder %s19, 0
      %p166 = por %p164, %p165
      %p167 = scmp.ne.s32.totalorder %s153, %s154
      %p168 = scmp.eq.s32.totalorder %s20, 1
      %p169 = por %p167, %p168
      %p171 = scmp.ne.s32.totalorder %s154, %s170
      %p172 = scmp.eq.s32.totalorder %s20, 0
      %p173 = por %p171, %p172
      %p174 = scmp.le.s32.totalorder 1, %s14
      %p175 = scmp.lt.s32.totalorder %s14, 3
      %p176 = pnand %p174, %p175
      %p177 = pneg %p176
      // Predicated region
      $region9: #{tpu_custom_call.1} parent=5 // pred_check
        _
      $region10: #{tpu_custom_call.1} parent=5 // pred_check_branch
        %179 = sbr.rel (%p176) target = $region12
      $region11: #{tpu_custom_call.1} parent=5 // pred_region
        %s180 = ssub.s32 %s14, 1
        // Predicated region
        $region13: #{tpu_custom_call.1} parent=11 // pred_check
          %p181 = pneg %p75
        $region14: #{tpu_custom_call.1} parent=11 // pred_check_branch
          %183 = sbr.rel (%p181) target = $region16
        $region15: #{tpu_custom_call.1} parent=11 // pred_region
          _
        $region16: #{tpu_custom_call.1} parent=11 // pred_fallthru
          _
        // Predicated region
        $region17: #{tpu_custom_call.1} parent=11 // pred_check
          %p184 = pneg %p96
        $region18: #{tpu_custom_call.1} parent=11 // pred_check_branch
          %186 = sbr.rel (%p184) target = $region20
        $region19: #{tpu_custom_call.1} parent=11 // pred_region
          _
        $region20: #{tpu_custom_call.1} parent=11 // pred_fallthru
          _
        // Predicated region
        $region21: #{tpu_custom_call.1} parent=11 // pred_check
          %p187 = pneg %p117
        $region22: #{tpu_custom_call.1} parent=11 // pred_check_branch
          %189 = sbr.rel (%p187) target = $region24
        $region23: #{tpu_custom_call.1} parent=11 // pred_region
          _
        $region24: #{tpu_custom_call.1} parent=11 // pred_fallthru
          _
        // Predicated region
        $region25: #{tpu_custom_call.1} parent=11 // pred_check
          %p190 = pneg %p138
        $region26: #{tpu_custom_call.1} parent=11 // pred_check_branch
          %192 = sbr.rel (%p190) target = $region28
        $region27: #{tpu_custom_call.1} parent=11 // pred_region
          _
        $region28: #{tpu_custom_call.1} parent=11 // pred_fallthru
          _
      $region12: #{tpu_custom_call.1} parent=5 // pred_fallthru
        _
      %p193 = scmp.lt.s32.totalorder %s14, 2
      // Predicated region
      $region29: #{tpu_custom_call.1} parent=5 // pred_check
        %p194 = pneg %p193
      $region30: #{tpu_custom_call.1} parent=5 // pred_check_branch
        %196 = sbr.rel (%p194) target = $region32
      $region31: #{tpu_custom_call.1} parent=5 // pred_region
        // Predicated region
        $region33: #{tpu_custom_call.1} parent=31 // pred_check
          %p197 = pneg %p48
        $region34: #{tpu_custom_call.1} parent=31 // pred_check_branch
          %199 = sbr.rel (%p197) target = $region36
        $region35: #{tpu_custom_call.1} parent=31 // pred_region
          %p200 = scmp.lt.s32.totalorder %s21, 1
          %s201 = scalar_select %p200, %s21, 1
          %p202 = scmp.lt.s32.totalorder %s22, 0
          %s203 = scalar_select %p202, %s22, 0
          %s204 = smul.addr %s201, 2
          %s205 = sadd.s32 %s203, %s204
          %s206 = smul.addr %s205, 4
          %s207 = scalar_lea.vmem %s0, %s206
        $region36: #{tpu_custom_call.1} parent=31 // pred_fallthru
          _
      $region32: #{tpu_custom_call.1} parent=5 // pred_fallthru
        _
      %p208 = scmp.le.s32.totalorder 1, %s14
      %p209 = scmp.lt.s32.totalorder %s14, 3
      %p210 = pnand %p208, %p209
      %p211 = pneg %p210
      // Predicated region
      $region37: #{tpu_custom_call.1} parent=5 // pred_check
        _
      $region38: #{tpu_custom_call.1} parent=5 // pred_check_branch
        %213 = sbr.rel (%p210) target = $region40
      $region39: #{tpu_custom_call.1} parent=5 // pred_region
        %s214 = ssub.s32 %s14, 1
        %p215 = scmp.lt.s32.totalorder %s23, 1
        %s216 = scalar_select %p215, %s23, 1
        %p217 = scmp.lt.s32.totalorder %s24, 0
        %s218 = scalar_select %p217, %s24, 0
        %s219 = smul.addr %s216, 2
        %s220 = sadd.s32 %s218, %s219
        %s221 = smul.addr %s220, 4
        %s222 = scalar_lea.vmem %s0, %s221
        %p223 = pneg %p54
        %p224 = pneg %p51
        %p225 = pneg %p75
        %p226 = pneg %p72
        %p227 = pneg %p96
        %p228 = pneg %p93
        %p229 = pneg %p117
        %p230 = pneg %p114
        %p231 = pneg %p138
        %p232 = pneg %p135
        %p233 = pneg %p166
        %p234 = pneg %p163
        %s235 = sand.u32 %s153, 1
        %s236 = scalar_lea.sflag [#allocation3], %s235
        %s237 = sand.u32 %s153, 1
        %s238 = smul.addr %s237, 8
        %s239 = scalar_lea.vmem [#allocation2], %s238
        %p240 = scmp.lt.s32.totalorder %s23, 1
        %s241 = scalar_select %p240, %s23, 1
        %p242 = scmp.lt.s32.totalorder %s24, 0
        %s243 = scalar_select %p242, %s24, 0
        %s244 = smul.addr %s241, 2
        %s245 = sadd.s32 %s243, %s244
        %s246 = smul.addr %s245, 4
        %s247 = scalar_lea.vmem %s0, %s246
        %v249 = vld [vmem:[%s247] sm:$0xf]
        %v250 = vld [vmem:[%s247 + $0x4] sm:$0x3]
        %v251 = vld [vmem:[%s1] sm:$0xf]
        %v252 = vld [vmem:[%s1 + $0x4] sm:$0xf]
        %v253 = vld [vmem:[%s1 + $0x8] sm:$0xf]
        %v254 = vld [vmem:[%s1 + $0xc] sm:$0xf]
        %v255 = vld [vmem:[%s2] sm:$0xff]
        %v256 = vld [vmem:[%s2 + $0x8] sm:$0xff]
        %v257 = vld [vmem:[%s2 + $0x10] sm:$0xff]
        %v258 = vld [vmem:[%s2 + $0x18] sm:$0xff]
        %260 = vset.pattern.permute.xlu0 0
        %261 = vperm.xlu0 %260, %v255
        %v262 = vpop.permute.xlu0 %261
        %265 = vset.pattern.permute.xlu0 0
        %266 = vperm.xlu0 %265, %v256
        %v267 = vpop.permute.xlu0 %266
        %270 = vset.pattern.permute.xlu0 0
        %271 = vperm.xlu0 %270, %v257
        %v272 = vpop.permute.xlu0 %271
        %275 = vset.pattern.permute.xlu0 0
        %276 = vperm.xlu0 %275, %v258
        %v277 = vpop.permute.xlu0 %276
        %v283 = vunpack.c.l.b16 %v251
        %v284 = vunpack.c.l.b16 %v252
        %v285 = vunpack.c.l.b16 %v253
        %v286 = vunpack.c.l.b16 %v254
        %v287 = vpack.c.b16 %v284, %v283
        %v288 = vpack.c.b16 %v286, %v285
        %v291 = vunpack.c.l.b16 %v249
        %v292 = vunpack.c.l.b16 %v250
        %v293 = vpack.c.b16 %v292, %v291
        %vm294 = vcmask 97280
        %v296 = vsel %vm294, %v287, 0
        %v299 = vsel %vm294, %v288, 0
        %vm301 = vcmask 1045504
        %v303 = vsel %vm301, %v293, 0
        %305 = vmatpush.bf16.msra.mxu0 0
        %306 = vmatpush.bf16.msra.mxu0 0
        %307 = vmatpush.bf16.msra.mxu0 0
        %308 = vmatpush.bf16.msra.mxu0 0
        %309 = vmatpush.bf16.msra.mxu0 0
        %310 = vmatpush.bf16.msra.mxu0 0
        %311 = vmatpush.bf16.msra.mxu0 0
        %312 = vmatpush.bf16.msra.mxu0 %v303
        %313 = vmatmul.bf16.gmra.mxu0 %v296
        %v314 = vpop.f32.mrf.mxu0
        %v315 = vadd.f32 %v262, %v314
        %v316 = vpop.f32.mrf.mxu0
        %v317 = vadd.f32 %v267, %v316
        %318 = vmatmul.bf16.gmra.mxu0 %v299
        %v319 = vpop.f32.mrf.mxu0
        %v320 = vadd.f32 %v272, %v319
        %v321 = vpop.f32.mrf.mxu0
        %v322 = vadd.f32 %v277, %v321
        %323 = vdwg.mxu0
        %v324 = vtanh.pop %v315
        %v325 = vtanh.pop %v317
        %v326 = vtanh.pop %v320
        %v327 = vtanh.pop %v322
        %v328 = vld [vmem:[%s3] sm:$0xff]
        %v329 = vld [vmem:[%s4] sm:$0xff]
        %331 = vset.pattern.permute.xlu0 0
        %332 = vperm.xlu0 %331, %v329
        %v333 = vpop.permute.xlu0 %332
        %vm335 = vcmask 261120
        %v337 = vsel %vm335, %v328, 0
        %339 = vmatpush.msra.mxu0 0.0
        %340 = vmatpush.msra.mxu0 0.0
        %341 = vmatpush.msra.mxu0 0.0
        %342 = vmatpush.msra.mxu0 0.0
        %343 = vmatpush.msra.mxu0 0.0
        %344 = vmatpush.msra.mxu0 0.0
        %345 = vmatpush.msra.mxu0 0.0
        %346 = vmatpush.msra.mxu0 0.0
        %347 = vmatpush.msra.mxu0 0.0
        %348 = vmatpush.msra.mxu0 0.0
        %349 = vmatpush.msra.mxu0 0.0
        %350 = vmatpush.msra.mxu0 0.0
        %351 = vmatpush.msra.mxu0 %v327
        %352 = vmatpush.msra.mxu0 %v326
        %353 = vmatpush.msra.mxu0 %v325
        %354 = vmatpush.msra.mxu0 %v324
        %355 = vmatmul.f32.gmra.mxu0 %v337
        %v356 = vpop.f32.mrf.mxu0
        %v357 = vadd.f32 %v333, %v356
        %358 = vdwg.mxu0
        %vm359 = vcmask 64512
        %360 = vst.msk [vmem:[%s239] sm:$0xff] %vm359, %v357
        %s361 = sand.u32 %s153, 1
        %s362 = scalar_lea.sflag [#allocation3], %s361
        %s363 = sand.u32 %s153, 1
        %s364 = smul.addr %s363, 8
        %s365 = scalar_lea.vmem [#allocation2], %s364
        // Predicated region
        $region41: #{tpu_custom_call.1} parent=39 // pred_check
          %p366 = pneg %p163
        $region42: #{tpu_custom_call.1} parent=39 // pred_check_branch
          %368 = sbr.rel (%p366) target = $region44
        $region43: #{tpu_custom_call.1} parent=39 // pred_region
          %370 = vsyncadd %s362, 0
          %s371 = sadd.s32 %s24, %s23
          %s372 = smul.addr %s371, 8
          %s373 = scalar_lea.hbm %s5, %s372
          %s375 = sshll.u32 %s365, 4
          %s376 = int_to_ptr.vmem [resolvable:$true] %s375
          %s377 = sshll.u32 %s373, 4
          %s378 = int_to_ptr.hbm [resolvable:$true] %s377
          %380 = dma.vmem_to_hbm [thread:$0]  %s376, 128, %s378, %s362
        $region44: #{tpu_custom_call.1} parent=39 // pred_fallthru
          _
      $region40: #{tpu_custom_call.1} parent=5 // pred_fallthru
        _
      %p381 = scmp.le.s32.totalorder 2, %s14
      // Predicated region
      $region45: #{tpu_custom_call.1} parent=5 // pred_check
        %p382 = pneg %p381
      $region46: #{tpu_custom_call.1} parent=5 // pred_check_branch
        %384 = sbr.rel (%p382) target = $region48
      $region47: #{tpu_custom_call.1} parent=5 // pred_region
        %s385 = ssub.s32 %s14, 2
        // Predicated region
        $region49: #{tpu_custom_call.1} parent=47 // pred_check
          %p386 = pneg %p169
        $region50: #{tpu_custom_call.1} parent=47 // pred_check_branch
          %388 = sbr.rel (%p386) target = $region52
        $region51: #{tpu_custom_call.1} parent=47 // pred_region
          %s389 = sand.u32 %s154, 1
          %s390 = scalar_lea.sflag [#allocation3], %s389
          %s391 = sand.u32 %s154, 1
          %s392 = smul.addr %s391, 8
          %s393 = scalar_lea.vmem [#allocation2], %s392
          %395 = dma.done %s390, 128
        $region52: #{tpu_custom_call.1} parent=47 // pred_fallthru
          _
      $region48: #{tpu_custom_call.1} parent=5 // pred_fallthru
        _
    $region6: #{tpu_custom_call.1} parent=1 // loop_footer
      %s18 = sadd.s32 1, %s14
    $region7: #{tpu_custom_call.1} parent=1 // loop_footer_branch
      %13 = sbr.rel target = $region3
    $region8: #{tpu_custom_call.1} parent=1 // loop_exit
      _
    %396 = vsyncpa [#allocation3], 1
    %s397 = scalar_lea.sflag [#allocation3], 1
    %398 = vsyncpa %s397, 1

</llo_original>
